<compile_context>
chip_gen: v5e
topology: v5e:2x2
jax: 0.10.0
libtpu: 0.0.40
codegen_flags: <defaults>
</compile_context>

<pallas_src>
import jax
import jax.numpy as jnp
from jax.experimental import pallas as pl
from jax.experimental.pallas import tpu as pltpu


_LARGE_TENSOR_BYTES = 8 * 1024 * 1024    # chunk the DMA above this size
_MAX_DMA_CHUNKS = 4                      # concurrent DMA streams for big copies
_TINY_BYPASS_BYTES = 256 * 1024          # below this, launch overhead dominates


def _lane_dense_2d(total, last_dim):
    """Pick a (rows, lanes) factorization of `total` elements.

    Prefers lane widths that are multiples of 128 AND row counts that are
    multiples of 8 (full sublane occupancy, e.g. 2048 -> (8, 256) not
    (1, 2048)); falls back to the widest 128-multiple, then to the original
    trailing dim.
    """
    if total % 128 == 0:
        # First pass: lane-dense AND sublane-dense (rows % 8 == 0).
        for lanes in (4096, 2048, 1024, 512, 256, 128):
            if total % lanes == 0 and (total // lanes) % 8 == 0:
                return total // lanes, lanes
        # Second pass: lane-dense only.
        for lanes in (4096, 2048, 1024, 512, 256, 128):
            if total % lanes == 0:
                return total // lanes, lanes
    last_dim = max(1, last_dim)
    if total % last_dim != 0:
        return total, 1
    return total // last_dim, last_dim


def _row_chunks(n_rows, nbytes):
    """Split the copy into a few row-contiguous chunks for concurrent DMAs."""
    if nbytes < _LARGE_TENSOR_BYTES or n_rows < _MAX_DMA_CHUNKS:
        return ((0, n_rows),)
    base, rem = divmod(n_rows, _MAX_DMA_CHUNKS)
    chunks, start = [], 0
    for i in range(_MAX_DMA_CHUNKS):
        size = base + (1 if i < rem else 0)
        if size > 0:
            chunks.append((start, size))
            start += size
    return tuple(chunks)


def _make_copy_kernel(chunks):
    """Kernel: direct HBM->HBM DMA of the whole tensor, chunked along rows."""

    def kernel(x_hbm, o_hbm, sems):
        copies = []
        for idx, (start, size) in enumerate(chunks):
            cp = pltpu.make_async_copy(
                x_hbm.at[pl.ds(start, size), :],
                o_hbm.at[pl.ds(start, size), :],
                sems.at[idx],
            )
            cp.start()
            copies.append(cp)
        for cp in copies:
            cp.wait()

    return kernel


def identity_pallas(x, *, force_kernel=False):
    """Identity forward pass: returns x unchanged (same shape, dtype, values)."""
    if x.size == 0:
        return x

    nbytes = x.size * jnp.dtype(x.dtype).itemsize
    if not force_kernel and nbytes < _TINY_BYPASS_BYTES:
        # A few-microsecond pallas launch dwarfs the actual data movement for
        # tiny tensors; Identity at the JAX level is just the input.
        return x

    orig_shape = x.shape
    last = x.shape[-1] if x.ndim >= 1 else 1
    R, C = _lane_dense_2d(x.size, last)
    x2 = x.reshape(R, C)

    chunks = _row_chunks(R, nbytes)
    kernel = _make_copy_kernel(chunks)

    out2 = pl.pallas_call(
        kernel,
        out_shape=jax.ShapeDtypeStruct((R, C), x2.dtype),
        in_specs=[pl.BlockSpec(memory_space=pl.ANY)],
        out_specs=pl.BlockSpec(memory_space=pl.ANY),
        scratch_shapes=[pltpu.SemaphoreType.DMA((len(chunks),))],
        # TODO(synk): when the caller actually donates x, pass
        # input_output_aliases={0: 0} with a touch-only body (or simply return
        # x) to make the op a true no-op instead of a copy.
    )(x2)

    return out2.reshape(orig_shape)


if __name__ == "__main__":
    key = jax.random.PRNGKey(0)
    # Small NCHW-like feature map consistent with the ConViT model.
    x = jax.random.normal(key, (2, 4, 16, 16), dtype=jnp.float32)

    y = identity_pallas(x, force_kernel=True)
    jax.block_until_ready(y)

    assert y.shape == x.shape and y.dtype == x.dtype
    assert bool(jnp.all(y == x))
    print("KERNEL_OK")
</pallas_src>

<mosaic_0001>
module attributes {stable_mosaic.version = 11 : i64} {
  func.func @kernel(%arg0: memref<8x256xf32, #tpu.memory_space<any>>, %arg1: memref<8x256xf32, #tpu.memory_space<any>>, %arg2: memref<1x!tpu.dma_semaphore, #tpu.memory_space<semaphore_mem>>) attributes {dimension_semantics = [], scalar_prefetch = 0 : i64, scratch_operands = 1 : i64, tpu.core_type = #tpu.core_type<tc>} {
    %c0_i32 = arith.constant 0 : i32
    %c0_i32_0 = arith.constant 0 : i32
    %c0_i32_1 = arith.constant 0 : i32
    %0 = tpu.memref_slice %arg0[%c0_i32_0, %c0_i32_1] : memref<8x256xf32, #tpu.memory_space<any>> -> memref<8x256xf32, #tpu.memory_space<any>>
    %c0_i32_2 = arith.constant 0 : i32
    %c0_i32_3 = arith.constant 0 : i32
    %1 = tpu.memref_slice %arg1[%c0_i32_2, %c0_i32_3] : memref<8x256xf32, #tpu.memory_space<any>> -> memref<8x256xf32, #tpu.memory_space<any>>
    %2 = tpu.memref_slice %arg2[%c0_i32] : memref<1x!tpu.dma_semaphore, #tpu.memory_space<semaphore_mem>> -> memref<1x!tpu.dma_semaphore, #tpu.memory_space<semaphore_mem>>
    %3 = tpu.memref_squeeze %2 : memref<1x!tpu.dma_semaphore, #tpu.memory_space<semaphore_mem>> -> memref<!tpu.dma_semaphore, #tpu.memory_space<semaphore_mem>>
    tpu.enqueue_dma source(%0 : memref<8x256xf32, #tpu.memory_space<any>>) target(%1 : memref<8x256xf32, #tpu.memory_space<any>>) target_semaphore(%3 : memref<!tpu.dma_semaphore, #tpu.memory_space<semaphore_mem>>)
    %c0_i32_4 = arith.constant 0 : i32
    %c0_i32_5 = arith.constant 0 : i32
    %c0_i32_6 = arith.constant 0 : i32
    %4 = tpu.memref_slice %arg0[%c0_i32_5, %c0_i32_6] : memref<8x256xf32, #tpu.memory_space<any>> -> memref<8x256xf32, #tpu.memory_space<any>>
    %c0_i32_7 = arith.constant 0 : i32
    %c0_i32_8 = arith.constant 0 : i32
    %5 = tpu.memref_slice %arg1[%c0_i32_7, %c0_i32_8] : memref<8x256xf32, #tpu.memory_space<any>> -> memref<8x256xf32, #tpu.memory_space<any>>
    %6 = tpu.memref_slice %arg2[%c0_i32_4] : memref<1x!tpu.dma_semaphore, #tpu.memory_space<semaphore_mem>> -> memref<1x!tpu.dma_semaphore, #tpu.memory_space<semaphore_mem>>
    %7 = tpu.memref_squeeze %6 : memref<1x!tpu.dma_semaphore, #tpu.memory_space<semaphore_mem>> -> memref<!tpu.dma_semaphore, #tpu.memory_space<semaphore_mem>>
    tpu.wait_dma2 semaphore(%7 : memref<!tpu.dma_semaphore, #tpu.memory_space<semaphore_mem>>) src(%4 : memref<8x256xf32, #tpu.memory_space<any>>) dst(%5 : memref<8x256xf32, #tpu.memory_space<any>>)
    return
  }
}

</mosaic_0001>

<llo_original>
// kernel: tpu_custom_call.1
$region0: #{tpu_custom_call.1}
  #allocation0 [shape = 'u32[]', space=smem, size = 0x4, offset = 0x4, fixed_abs, tag = 'smem constant byte address 0x4 - core index']
  #allocation1 [shape = 'u32[72,128]{1,0:T(1,128)}', space=vmem, size = 0x9000, scoped, tag = 'internal scratch']
  #allocation2 [shape = 's32[1]{0}', space=sflag, size = 0x4, scoped, tag = 'scratch operand']
  #allocation3 [shape = 's32[]', space=sflag, size = 0x4, offset = 0, fixed_abs, tag = 'sflag constant byte address 0x0 - dummy sync flag']
  #allocation4 [shape = 'u32[0]{0}', space=smem, size = 0, offset = 0, fixed_abs, tag = 'smem constant byte address 0x0 - null']
  %s0 = inlined_call_operand.hbm [shape: f32[8,256], index: 0, kind: input, shape index: {}]
  %s1 = inlined_call_operand.hbm [shape: f32[8,256], index: 1, kind: output, shape index: {}]
  %s2 = sld [smem:[#allocation0]]
  $region2: #{tpu_custom_call.1} parent=0
    _
  %s4 = ssub.s32 1, %s2
  %s5 = scalar_select 0, %s4, %s2
  %s7 = sshll.u32 1, 14
  %s8 = sxor.u32 4294967295, %s7
  %s10 = sshll.u32 %s0, 4
  %s11 = int_to_ptr.hbm [resolvable:$true] %s10
  %s12 = sshll.u32 %s1, 4
  %s13 = int_to_ptr.hbm [resolvable:$true] %s12
  %16 = dma.general %s11, 256, %s13, [#allocation2], [#allocation3], [#allocation4], 0, 0
  %s17 = smul.u32 8, 1
  %s18 = smul.u32 %s17, 2
  %s19 = sshll.u32 %s18, 4
  %20 = dma.done [#allocation2], %s19
  %21 = vsyncmov [#allocation2]
  %s22 = vpop.sfrf %21
  %p23 = scmp.eq.s32.totalorder %s22, 0
  %p24 = pneg %p23
  %26 = shalt.err (%p24)

</llo_original>
